<compile_context>
chip_gen: v5e
topology: v5e:2x2
jax: 0.10.0
libtpu: 0.0.40
codegen_flags: <defaults>
</compile_context>

<pallas_src>
import functools

import jax
import jax.numpy as jnp
from jax.experimental import pallas as pl
from jax.experimental.pallas import tpu as pltpu


def _round_up(x, m):
    return (x + m - 1) // m * m


def _multibox_kernel(loc_p_ref, loc_t_ref, cls_p_ref, cls_t_ref, out_ref,
                     *, n_anchors, tile, tiles_per_split):
    c = pl.program_id(0)   # split (megacore) axis
    k = pl.program_id(1)   # reduction axis over anchor-lane tiles

    @pl.when(k == 0)
    def _():
        out_ref[...] = jnp.zeros_like(out_ref)

    cls_t = cls_t_ref[...]                                  # (1, TL) int32
    pos_raw = cls_t != 0                                    # (1, TL) bool

    # ---- smooth L1 (beta=1.0, 'sum'); the 4 box coords sit on sublanes ----
    d = loc_p_ref[...].astype(jnp.float32) - loc_t_ref[...].astype(jnp.float32)
    ad = jnp.abs(d)
    sl1 = jnp.where(ad < 1.0, 0.5 * d * d, ad - 0.5)        # (4, TL)
    sl1_row = jnp.sum(sl1, axis=0, keepdims=True)           # (1, TL)

    # ---- softmax cross entropy over all anchors ('sum'); classes on sublanes
    logits = cls_p_ref[...].astype(jnp.float32)             # (C, TL)
    m = jnp.max(logits, axis=0, keepdims=True)              # (1, TL)
    e = jnp.exp(logits - m)
    lse = m + jnp.log(jnp.sum(e, axis=0, keepdims=True))    # (1, TL)
    cls_iota = jax.lax.broadcasted_iota(jnp.int32, logits.shape, 0)
    # NOTE: labels >= C silently yield tgt=0 here (PyTorch would raise).
    tgt = jnp.sum(jnp.where(cls_iota == cls_t, logits, 0.0),
                  axis=0, keepdims=True)
    ce_row = lse - tgt                                       # (1, TL)

    # Unclamped element offset of this block (for bounds checking only).
    base = (c * tiles_per_split + k) * tile

    # Fast path: fully in-bounds blocks skip the iota/mask/select work.
    @pl.when(base + tile <= n_anchors)
    def _():
        out_ref[0, 0:1, :] += jnp.where(pos_raw, sl1_row, 0.0) + ce_row
        out_ref[0, 1:2, :] += pos_raw.astype(jnp.float32)

    # Slow path: ragged tail and clamped (duplicate) blocks of a padded split.
    # jnp.where (not multiply) so garbage lanes cannot inject NaN/Inf.
    @pl.when(base + tile > n_anchors)
    def _():
        col = base + jax.lax.broadcasted_iota(jnp.int32, (1, tile), 1)
        valid = col < n_anchors
        pos = jnp.logical_and(valid, pos_raw)
        out_ref[0, 0:1, :] += (jnp.where(pos, sl1_row, 0.0)
                               + jnp.where(valid, ce_row, 0.0))
        out_ref[0, 1:2, :] += pos.astype(jnp.float32)


@functools.partial(jax.jit, static_argnames=("tile", "splits"))
def multibox_loss(loc_p, cls_p, loc_t, cls_t, tile=32768, splits=1):
    """loc_p: (B,A,4) float, cls_p: (B,A,C) float, loc_t: (B,A,4) float,
    cls_t: (B,A) int.  `tile` = anchors per grid step (lanes).  Use splits=2
    on v7x (two TensorCores); splits=1 on v5e/v6e."""
    B, A, dloc = loc_p.shape
    C = cls_p.shape[-1]
    N = B * A

    # Channel-major repack: anchors -> lanes (dense), coords/classes -> sublanes.
    # The transposes are one XLA copy each; cls_t's reshape is free.  No pads.
    loc_p = loc_p.reshape(N, dloc).T           # (4, N)
    loc_t = loc_t.reshape(N, dloc).T           # (4, N)
    cls_p = cls_p.reshape(N, C).T              # (C, N)
    cls_t = cls_t.reshape(1, N).astype(jnp.int32)

    # Anchor tile (lanes), multiple of 128; ragged tail handled in-kernel.
    tile_eff = min(_round_up(max(tile, 128), 128), _round_up(N, 128))
    n_blocks = pl.cdiv(N, tile_eff)
    splits_eff = max(1, min(splits, n_blocks))
    tpc = pl.cdiv(n_blocks, splits_eff)        # anchor tiles per split

    def col_map(c, k):
        # Clamp so a padded split never maps past the array; the in-kernel
        # bounds mask (computed from the UNclamped offset) zeroes such blocks.
        return (0, jnp.minimum(c * tpc + k, n_blocks - 1))

    kernel = functools.partial(_multibox_kernel, n_anchors=N, tile=tile_eff,
                               tiles_per_split=tpc)

    out = pl.pallas_call(
        kernel,
        out_shape=jax.ShapeDtypeStruct((splits_eff, 2, tile_eff), jnp.float32),
        grid_spec=pltpu.PrefetchScalarGridSpec(
            num_scalar_prefetch=0,
            grid=(splits_eff, tpc),
            in_specs=[
                pl.BlockSpec((dloc, tile_eff), col_map),
                pl.BlockSpec((dloc, tile_eff), col_map),
                pl.BlockSpec((C, tile_eff), col_map),
                pl.BlockSpec((1, tile_eff), col_map),
            ],
            out_specs=pl.BlockSpec((1, 2, tile_eff), lambda c, k: (c, 0, 0)),
        ),
        compiler_params=pltpu.CompilerParams(
            dimension_semantics=("parallel", "arbitrary")),
    )(loc_p, loc_t, cls_p, cls_t)

    # Tiny glue reduce over lane-wise partials (better numerics than a
    # sequential in-kernel scalar accumulator).
    loss_sum = jnp.sum(out[:, 0, :])           # loc_sum + ce_sum
    num_pos = jnp.sum(out[:, 1, :])
    return jnp.where(num_pos > 0.0, loss_sum / jnp.maximum(num_pos, 1.0), 0.0)


def _reference_loss(loc_p, cls_p, loc_t, cls_t):
    """Pure-JAX reference matching the PyTorch default branch."""
    C = cls_p.shape[-1]
    pos = (cls_t != 0)
    num_pos = jnp.sum(pos).astype(jnp.float32)

    d = loc_p.astype(jnp.float32) - loc_t.astype(jnp.float32)
    ad = jnp.abs(d)
    sl1 = jnp.where(ad < 1.0, 0.5 * d * d, ad - 0.5)
    loc_loss = jnp.sum(jnp.sum(sl1, axis=-1) * pos) / jnp.maximum(num_pos, 1.0)

    logits = cls_p.reshape(-1, C).astype(jnp.float32)
    labels = cls_t.reshape(-1)
    lse = jax.scipy.special.logsumexp(logits, axis=-1)
    tgt = jnp.take_along_axis(logits, labels[:, None], axis=-1)[:, 0]
    cls_loss = jnp.sum(lse - tgt) / jnp.maximum(num_pos, 1.0)
    return jnp.where(num_pos > 0, loc_loss + cls_loss, 0.0)


if __name__ == "__main__":
    key = jax.random.PRNGKey(0)
    B, A, C = 2, 64, 8          # 2 images, 64 anchors each, 8 classes
    k1, k2, k3, k4 = jax.random.split(key, 4)

    loc_p = jax.random.normal(k1, (B, A, 4), jnp.float32)
    loc_t = jax.random.normal(k2, (B, A, 4), jnp.float32)
    cls_p = jax.random.normal(k3, (B, A, C), jnp.float32)
    # ~25% positive anchors, rest background (class 0)
    raw = jax.random.randint(k4, (B, A), 0, 4 * C)
    cls_t = jnp.where(raw < C, raw, 0).astype(jnp.int32)

    loss = multibox_loss(loc_p, cls_p, loc_t, cls_t)
    loss = jax.block_until_ready(loss)

    ref = _reference_loss(loc_p, cls_p, loc_t, cls_t)
    assert jnp.allclose(loss, ref, rtol=1e-5, atol=1e-5), (loss, ref)

    # num_pos == 0 branch (returns 0.0); same shapes so no recompile.
    loss0 = jax.block_until_ready(
        multibox_loss(loc_p, cls_p, loc_t, jnp.zeros_like(cls_t)))
    assert jnp.allclose(loss0, 0.0), loss0

    # TODO(synk): pos_neg_ratio (hard-negative top-k mining) and 'focal'
    # branches, the optional `ignore` mask, and the random debug print are not
    # part of the default config and are not implemented here.
    print("KERNEL_OK")
</pallas_src>

<mosaic_0001>
module attributes {stable_mosaic.version = 11 : i64} {
  func.func @_multibox_kernel(%arg0: i32, %arg1: i32, %arg2: memref<4x128xf32, #tpu.memory_space<vmem>>, %arg3: memref<4x128xf32, #tpu.memory_space<vmem>>, %arg4: memref<8x128xf32, #tpu.memory_space<vmem>>, %arg5: memref<1x128xi32, #tpu.memory_space<vmem>>, %arg6: memref<1x2x128xf32, #tpu.memory_space<vmem>>) attributes {dimension_semantics = [#tpu.dimension_semantics<parallel>, #tpu.dimension_semantics<arbitrary>], iteration_bounds = array<i64: 1, 1>, scalar_prefetch = 0 : i64, scratch_operands = 0 : i64, tpu.core_type = #tpu.core_type<tc>, window_params = [{transform_indices = @transform_0, window_bounds = array<i64: 4, 128>}, {transform_indices = @transform_1, window_bounds = array<i64: 4, 128>}, {transform_indices = @transform_2, window_bounds = array<i64: 8, 128>}, {transform_indices = @transform_3, window_bounds = array<i64: 1, 128>}, {transform_indices = @transform_4, window_bounds = array<i64: 1, 2, 128>}]} {
    %c0_i32 = arith.constant 0 : i32
    %0 = arith.cmpi eq, %arg1, %c0_i32 : i32
    %1 = arith.extui %0 : i1 to i32
    %c0_i32_0 = arith.constant 0 : i32
    %2 = arith.cmpi ne, %1, %c0_i32_0 : i32
    scf.if %2 {
      %cst_22 = arith.constant 0.000000e+00 : f32
      %49 = vector.broadcast %cst_22 : f32 to vector<1x2x128xf32>
      %c0_23 = arith.constant 0 : index
      %c0_24 = arith.constant 0 : index
      %c0_25 = arith.constant 0 : index
      %50 = vector.load %arg6[%c0_23, %c0_24, %c0_25] : memref<1x2x128xf32, #tpu.memory_space<vmem>>, vector<1x2x128xf32>
      tpu.vector_store %arg6[%c0_23, %c0_24, %c0_25], %49 {strides = array<i32>} : memref<1x2x128xf32, #tpu.memory_space<vmem>>, vector<1x2x128xf32>,
    } else {
    }
    %c0 = arith.constant 0 : index
    %c0_1 = arith.constant 0 : index
    %3 = vector.load %arg5[%c0, %c0_1] : memref<1x128xi32, #tpu.memory_space<vmem>>, vector<1x128xi32>
    %c0_i32_2 = arith.constant 0 : i32
    %4 = vector.broadcast %c0_i32_2 : i32 to vector<1x128xi32>
    %5 = arith.cmpi ne, %3, %4 : vector<1x128xi32>
    %c0_3 = arith.constant 0 : index
    %c0_4 = arith.constant 0 : index
    %6 = vector.load %arg2[%c0_3, %c0_4] : memref<4x128xf32, #tpu.memory_space<vmem>>, vector<4x128xf32>
    %c0_5 = arith.constant 0 : index
    %c0_6 = arith.constant 0 : index
    %7 = vector.load %arg3[%c0_5, %c0_6] : memref<4x128xf32, #tpu.memory_space<vmem>>, vector<4x128xf32>
    %8 = arith.subf %6, %7 : vector<4x128xf32>
    %9 = math.absf %8 : vector<4x128xf32>
    %cst = arith.constant 1.000000e+00 : f32
    %10 = vector.broadcast %cst : f32 to vector<4x128xf32>
    %11 = arith.cmpf olt, %9, %10 : vector<4x128xf32>
    %cst_7 = arith.constant 5.000000e-01 : f32
    %12 = vector.broadcast %cst_7 : f32 to vector<4x128xf32>
    %13 = arith.mulf %12, %8 : vector<4x128xf32>
    %14 = arith.mulf %13, %8 : vector<4x128xf32>
    %cst_8 = arith.constant 5.000000e-01 : f32
    %15 = vector.broadcast %cst_8 : f32 to vector<4x128xf32>
    %16 = arith.subf %9, %15 : vector<4x128xf32>
    %17 = arith.select %11, %14, %16 : vector<4x128xi1>, vector<4x128xf32>
    %cst_9 = arith.constant dense<0.000000e+00> : vector<128xf32>
    %18 = vector.multi_reduction <add>, %17, %cst_9 [0] : vector<4x128xf32> to vector<128xf32>
    %19 = vector.shape_cast %18 : vector<128xf32> to vector<1x128xf32>
    %c0_10 = arith.constant 0 : index
    %c0_11 = arith.constant 0 : index
    %20 = vector.load %arg4[%c0_10, %c0_11] : memref<8x128xf32, #tpu.memory_space<vmem>>, vector<8x128xf32>
    %cst_12 = arith.constant dense<0xFF800000> : vector<128xf32>
    %21 = vector.multi_reduction <maximumf>, %20, %cst_12 [0] : vector<8x128xf32> to vector<128xf32>
    %22 = vector.shape_cast %21 : vector<128xf32> to vector<1x128xf32>
    %23 = vector.broadcast %22 : vector<1x128xf32> to vector<8x128xf32>
    %24 = arith.subf %20, %23 : vector<8x128xf32>
    %25 = math.exp %24 : vector<8x128xf32>
    %cst_13 = arith.constant dense<0.000000e+00> : vector<128xf32>
    %26 = vector.multi_reduction <add>, %25, %cst_13 [0] : vector<8x128xf32> to vector<128xf32>
    %27 = vector.shape_cast %26 : vector<128xf32> to vector<1x128xf32>
    %28 = math.log %27 : vector<1x128xf32>
    %29 = arith.addf %22, %28 : vector<1x128xf32>
    %30 = tpu.iota {dimensions = array<i32: 0>} : vector<8x128xi32>
    %31 = vector.broadcast %3 : vector<1x128xi32> to vector<8x128xi32>
    %32 = arith.cmpi eq, %30, %31 : vector<8x128xi32>
    %cst_14 = arith.constant 0.000000e+00 : f32
    %33 = vector.broadcast %cst_14 : f32 to vector<8x128xf32>
    %34 = arith.select %32, %20, %33 : vector<8x128xi1>, vector<8x128xf32>
    %cst_15 = arith.constant dense<0.000000e+00> : vector<128xf32>
    %35 = vector.multi_reduction <add>, %34, %cst_15 [0] : vector<8x128xf32> to vector<128xf32>
    %36 = vector.shape_cast %35 : vector<128xf32> to vector<1x128xf32>
    %37 = arith.subf %29, %36 : vector<1x128xf32>
    %c1_i32 = arith.constant 1 : i32
    %38 = arith.muli %arg0, %c1_i32 : i32
    %39 = arith.addi %38, %arg1 : i32
    %c128_i32 = arith.constant 128 : i32
    %40 = arith.muli %39, %c128_i32 : i32
    %c128_i32_16 = arith.constant 128 : i32
    %41 = arith.addi %40, %c128_i32_16 : i32
    %c128_i32_17 = arith.constant 128 : i32
    %42 = arith.cmpi sle, %41, %c128_i32_17 : i32
    %43 = arith.extui %42 : i1 to i32
    %c0_i32_18 = arith.constant 0 : i32
    %44 = arith.cmpi ne, %43, %c0_i32_18 : i32
    scf.if %44 {
      %c0_22 = arith.constant 0 : index
      %c0_23 = arith.constant 0 : index
      %c0_24 = arith.constant 0 : index
      %49 = vector.load %arg6[%c0_22, %c0_23, %c0_24] : memref<1x2x128xf32, #tpu.memory_space<vmem>>, vector<1x1x128xf32>
      %50 = vector.shape_cast %49 : vector<1x1x128xf32> to vector<1x128xf32>
      %cst_25 = arith.constant 0.000000e+00 : f32
      %51 = vector.broadcast %cst_25 : f32 to vector<1x128xf32>
      %52 = arith.select %5, %19, %51 : vector<1x128xi1>, vector<1x128xf32>
      %53 = arith.addf %52, %37 : vector<1x128xf32>
      %54 = arith.addf %50, %53 : vector<1x128xf32>
      %c0_26 = arith.constant 0 : index
      %c0_27 = arith.constant 0 : index
      %c0_28 = arith.constant 0 : index
      %55 = vector.load %arg6[%c0_26, %c0_27, %c0_28] : memref<1x2x128xf32, #tpu.memory_space<vmem>>, vector<1x1x128xf32>
      %56 = vector.shape_cast %55 : vector<1x1x128xf32> to vector<1x128xf32>
      %57 = vector.shape_cast %54 : vector<1x128xf32> to vector<1x1x128xf32>
      tpu.vector_store %arg6[%c0_26, %c0_27, %c0_28], %57 {strides = array<i32>} : memref<1x2x128xf32, #tpu.memory_space<vmem>>, vector<1x1x128xf32>,
      %c0_29 = arith.constant 0 : index
      %c1 = arith.constant 1 : index
      %c0_30 = arith.constant 0 : index
      %58 = vector.load %arg6[%c0_29, %c1, %c0_30] : memref<1x2x128xf32, #tpu.memory_space<vmem>>, vector<1x1x128xf32>
      %59 = vector.shape_cast %58 : vector<1x1x128xf32> to vector<1x128xf32>
      %60 = arith.extui %5 : vector<1x128xi1> to vector<1x128xi32>
      %61 = arith.sitofp %60 : vector<1x128xi32> to vector<1x128xf32>
      %62 = arith.addf %59, %61 : vector<1x128xf32>
      %c0_31 = arith.constant 0 : index
      %c1_32 = arith.constant 1 : index
      %c0_33 = arith.constant 0 : index
      %63 = vector.load %arg6[%c0_31, %c1_32, %c0_33] : memref<1x2x128xf32, #tpu.memory_space<vmem>>, vector<1x1x128xf32>
      %64 = vector.shape_cast %63 : vector<1x1x128xf32> to vector<1x128xf32>
      %65 = vector.shape_cast %62 : vector<1x128xf32> to vector<1x1x128xf32>
      tpu.vector_store %arg6[%c0_31, %c1_32, %c0_33], %65 {strides = array<i32>} : memref<1x2x128xf32, #tpu.memory_space<vmem>>, vector<1x1x128xf32>,
    } else {
    }
    %c128_i32_19 = arith.constant 128 : i32
    %45 = arith.addi %40, %c128_i32_19 : i32
    %c128_i32_20 = arith.constant 128 : i32
    %46 = arith.cmpi sgt, %45, %c128_i32_20 : i32
    %47 = arith.extui %46 : i1 to i32
    %c0_i32_21 = arith.constant 0 : i32
    %48 = arith.cmpi ne, %47, %c0_i32_21 : i32
    scf.if %48 {
      %49 = tpu.iota {dimensions = array<i32: 1>} : vector<1x128xi32>
      %50 = vector.broadcast %40 : i32 to vector<1x128xi32>
      %51 = arith.addi %50, %49 : vector<1x128xi32>
      %c128_i32_22 = arith.constant 128 : i32
      %52 = vector.broadcast %c128_i32_22 : i32 to vector<1x128xi32>
      %53 = arith.cmpi slt, %51, %52 : vector<1x128xi32>
      %54 = arith.andi %53, %5 : vector<1x128xi1>
      %c0_23 = arith.constant 0 : index
      %c0_24 = arith.constant 0 : index
      %c0_25 = arith.constant 0 : index
      %55 = vector.load %arg6[%c0_23, %c0_24, %c0_25] : memref<1x2x128xf32, #tpu.memory_space<vmem>>, vector<1x1x128xf32>
      %56 = vector.shape_cast %55 : vector<1x1x128xf32> to vector<1x128xf32>
      %cst_26 = arith.constant 0.000000e+00 : f32
      %57 = vector.broadcast %cst_26 : f32 to vector<1x128xf32>
      %58 = arith.select %54, %19, %57 : vector<1x128xi1>, vector<1x128xf32>
      %cst_27 = arith.constant 0.000000e+00 : f32
      %59 = vector.broadcast %cst_27 : f32 to vector<1x128xf32>
      %60 = arith.select %53, %37, %59 : vector<1x128xi1>, vector<1x128xf32>
      %61 = arith.addf %58, %60 : vector<1x128xf32>
      %62 = arith.addf %56, %61 : vector<1x128xf32>
      %c0_28 = arith.constant 0 : index
      %c0_29 = arith.constant 0 : index
      %c0_30 = arith.constant 0 : index
      %63 = vector.load %arg6[%c0_28, %c0_29, %c0_30] : memref<1x2x128xf32, #tpu.memory_space<vmem>>, vector<1x1x128xf32>
      %64 = vector.shape_cast %63 : vector<1x1x128xf32> to vector<1x128xf32>
      %65 = vector.shape_cast %62 : vector<1x128xf32> to vector<1x1x128xf32>
      tpu.vector_store %arg6[%c0_28, %c0_29, %c0_30], %65 {strides = array<i32>} : memref<1x2x128xf32, #tpu.memory_space<vmem>>, vector<1x1x128xf32>,
      %c0_31 = arith.constant 0 : index
      %c1 = arith.constant 1 : index
      %c0_32 = arith.constant 0 : index
      %66 = vector.load %arg6[%c0_31, %c1, %c0_32] : memref<1x2x128xf32, #tpu.memory_space<vmem>>, vector<1x1x128xf32>
      %67 = vector.shape_cast %66 : vector<1x1x128xf32> to vector<1x128xf32>
      %68 = arith.extui %54 : vector<1x128xi1> to vector<1x128xi32>
      %69 = arith.sitofp %68 : vector<1x128xi32> to vector<1x128xf32>
      %70 = arith.addf %67, %69 : vector<1x128xf32>
      %c0_33 = arith.constant 0 : index
      %c1_34 = arith.constant 1 : index
      %c0_35 = arith.constant 0 : index
      %71 = vector.load %arg6[%c0_33, %c1_34, %c0_35] : memref<1x2x128xf32, #tpu.memory_space<vmem>>, vector<1x1x128xf32>
      %72 = vector.shape_cast %71 : vector<1x1x128xf32> to vector<1x128xf32>
      %73 = vector.shape_cast %70 : vector<1x128xf32> to vector<1x1x128xf32>
      tpu.vector_store %arg6[%c0_33, %c1_34, %c0_35], %73 {strides = array<i32>} : memref<1x2x128xf32, #tpu.memory_space<vmem>>, vector<1x1x128xf32>,
    } else {
    }
    return
  }
  func.func @transform_0(%arg0: i32, %arg1: i32) -> (i32, i32) {
    %c1_i32 = arith.constant 1 : i32
    %0 = arith.muli %arg0, %c1_i32 : i32
    %1 = arith.addi %0, %arg1 : i32
    %c0_i32 = arith.constant 0 : i32
    %2 = arith.minsi %1, %c0_i32 : i32
    %c0_i32_0 = arith.constant 0 : i32
    %c0_i32_1 = arith.constant 0 : i32
    return %c0_i32_0, %2 : i32, i32
  }
  func.func @transform_1(%arg0: i32, %arg1: i32) -> (i32, i32) {
    %c1_i32 = arith.constant 1 : i32
    %0 = arith.muli %arg0, %c1_i32 : i32
    %1 = arith.addi %0, %arg1 : i32
    %c0_i32 = arith.constant 0 : i32
    %2 = arith.minsi %1, %c0_i32 : i32
    %c0_i32_0 = arith.constant 0 : i32
    %c0_i32_1 = arith.constant 0 : i32
    return %c0_i32_0, %2 : i32, i32
  }
  func.func @transform_2(%arg0: i32, %arg1: i32) -> (i32, i32) {
    %c1_i32 = arith.constant 1 : i32
    %0 = arith.muli %arg0, %c1_i32 : i32
    %1 = arith.addi %0, %arg1 : i32
    %c0_i32 = arith.constant 0 : i32
    %2 = arith.minsi %1, %c0_i32 : i32
    %c0_i32_0 = arith.constant 0 : i32
    %c0_i32_1 = arith.constant 0 : i32
    return %c0_i32_0, %2 : i32, i32
  }
  func.func @transform_3(%arg0: i32, %arg1: i32) -> (i32, i32) {
    %c1_i32 = arith.constant 1 : i32
    %0 = arith.muli %arg0, %c1_i32 : i32
    %1 = arith.addi %0, %arg1 : i32
    %c0_i32 = arith.constant 0 : i32
    %2 = arith.minsi %1, %c0_i32 : i32
    %c0_i32_0 = arith.constant 0 : i32
    %c0_i32_1 = arith.constant 0 : i32
    return %c0_i32_0, %2 : i32, i32
  }
  func.func @transform_4(%arg0: i32, %arg1: i32) -> (i32, i32, i32) {
    %c0_i32 = arith.constant 0 : i32
    %c0_i32_0 = arith.constant 0 : i32
    %c0_i32_1 = arith.constant 0 : i32
    return %arg0, %c0_i32, %c0_i32_0 : i32, i32, i32
  }
}

</mosaic_0001>

<llo_original>
// kernel: multibox_loss.1
$region0: #{multibox_loss.1}
  #allocation0 [shape = 'u32[]', space=smem, size = 0x4, offset = 0x4, fixed_abs, tag = 'smem constant byte address 0x4 - core index']
  #allocation1 [shape = 'u32[72,128]{1,0:T(1,128)}', space=vmem, size = 0x9000, scoped, tag = 'internal scratch']
  %s0 = inlined_call_operand.vmem [shape: f32[4,128], index: 0, kind: input, shape index: {}]
  %s1 = inlined_call_operand.vmem [shape: f32[4,128], index: 1, kind: input, shape index: {}]
  %s2 = inlined_call_operand.vmem [shape: f32[8,128], index: 2, kind: input, shape index: {}]
  %s3 = inlined_call_operand.vmem [shape: s32[1,128], index: 3, kind: input, shape index: {}]
  %s4 = inlined_call_operand.vmem [shape: f32[1,2,128], index: 4, kind: output, shape index: {}]
  %s5 = sld [smem:[#allocation0]]
  $region38: #{multibox_loss.1} parent=0
    _
  %s7 = ssub.s32 1, %s5
  %s8 = scalar_select 0, %s7, %s5
  // Predicated region
  $region2: #{multibox_loss.1} parent=0 // pred_check
    _
  $region3: #{multibox_loss.1} parent=0 // pred_check_branch
    %10 = sbr.rel (0) target = $region5
  $region4: #{multibox_loss.1} parent=0 // pred_region
    %s11 = sadd.s32 0, 0
    %p12 = scmp.lt.s32.totalorder %s11, 0
    %s13 = scalar_select %p12, %s11, 0
    %p14 = scmp.lt.s32.totalorder %s13, 0
    %s15 = scalar_select %p14, %s13, 0
    %s16 = smul.addr %s15, 4
    %s17 = scalar_lea.vmem %s0, %s16
    %s18 = sadd.s32 0, 0
    %p19 = scmp.lt.s32.totalorder %s18, 0
    %s20 = scalar_select %p19, %s18, 0
  $region5: #{multibox_loss.1} parent=0 // pred_fallthru
    _
  // Predicated region
  $region6: #{multibox_loss.1} parent=0 // pred_check
    _
  $region7: #{multibox_loss.1} parent=0 // pred_check_branch
    %22 = sbr.rel (0) target = $region9
  $region8: #{multibox_loss.1} parent=0 // pred_region
    %s23 = sadd.s32 0, 0
    %p24 = scmp.lt.s32.totalorder %s23, 0
    %s25 = scalar_select %p24, %s23, 0
    %p26 = scmp.lt.s32.totalorder %s25, 0
    %s27 = scalar_select %p26, %s25, 0
    %s28 = smul.addr %s27, 4
    %s29 = scalar_lea.vmem %s1, %s28
    %s30 = sadd.s32 0, 0
    %p31 = scmp.lt.s32.totalorder %s30, 0
    %s32 = scalar_select %p31, %s30, 0
  $region9: #{multibox_loss.1} parent=0 // pred_fallthru
    _
  // Predicated region
  $region10: #{multibox_loss.1} parent=0 // pred_check
    _
  $region11: #{multibox_loss.1} parent=0 // pred_check_branch
    %34 = sbr.rel (0) target = $region13
  $region12: #{multibox_loss.1} parent=0 // pred_region
    %s35 = sadd.s32 0, 0
    %p36 = scmp.lt.s32.totalorder %s35, 0
    %s37 = scalar_select %p36, %s35, 0
    %p38 = scmp.lt.s32.totalorder %s37, 0
    %s39 = scalar_select %p38, %s37, 0
    %s40 = smul.addr %s39, 8
    %s41 = scalar_lea.vmem %s2, %s40
    %s42 = sadd.s32 0, 0
    %p43 = scmp.lt.s32.totalorder %s42, 0
    %s44 = scalar_select %p43, %s42, 0
  $region13: #{multibox_loss.1} parent=0 // pred_fallthru
    _
  // Predicated region
  $region14: #{multibox_loss.1} parent=0 // pred_check
    _
  $region15: #{multibox_loss.1} parent=0 // pred_check_branch
    %46 = sbr.rel (0) target = $region17
  $region16: #{multibox_loss.1} parent=0 // pred_region
    %s47 = sadd.s32 0, 0
    %p48 = scmp.lt.s32.totalorder %s47, 0
    %s49 = scalar_select %p48, %s47, 0
    %p50 = scmp.lt.s32.totalorder %s49, 0
    %s51 = scalar_select %p50, %s49, 0
    %s52 = scalar_lea.vmem %s3, %s51
    %s53 = sadd.s32 0, 0
    %p54 = scmp.lt.s32.totalorder %s53, 0
    %s55 = scalar_select %p54, %s53, 0
  $region17: #{multibox_loss.1} parent=0 // pred_fallthru
    _
  %s56 = sadd.s32 0, 0
  %p57 = scmp.lt.s32.totalorder %s56, 0
  %s58 = scalar_select %p57, %s56, 0
  %p59 = scmp.lt.s32.totalorder %s58, 0
  %s60 = scalar_select %p59, %s58, 0
  %s61 = smul.addr %s60, 4
  %s62 = scalar_lea.vmem %s0, %s61
  %s63 = sadd.s32 0, 0
  %p64 = scmp.lt.s32.totalorder %s63, 0
  %s65 = scalar_select %p64, %s63, 0
  %p66 = scmp.lt.s32.totalorder %s65, 0
  %s67 = scalar_select %p66, %s65, 0
  %s68 = smul.addr %s67, 4
  %s69 = scalar_lea.vmem %s1, %s68
  %s70 = sadd.s32 0, 0
  %p71 = scmp.lt.s32.totalorder %s70, 0
  %s72 = scalar_select %p71, %s70, 0
  %p73 = scmp.lt.s32.totalorder %s72, 0
  %s74 = scalar_select %p73, %s72, 0
  %s75 = smul.addr %s74, 8
  %s76 = scalar_lea.vmem %s2, %s75
  %s77 = sadd.s32 0, 0
  %p78 = scmp.lt.s32.totalorder %s77, 0
  %s79 = scalar_select %p78, %s77, 0
  %p80 = scmp.lt.s32.totalorder %s79, 0
  %s81 = scalar_select %p80, %s79, 0
  %s82 = scalar_lea.vmem %s3, %s81
  %s83 = sadd.s32 0, 0
  %p84 = scmp.lt.s32.totalorder %s83, 0
  %s85 = scalar_select %p84, %s83, 0
  %p86 = scmp.lt.s32.totalorder %s85, 0
  %s87 = scalar_select %p86, %s85, 0
  %s88 = smul.addr %s87, 4
  %s89 = scalar_lea.vmem %s0, %s88
  %s90 = sadd.s32 0, 0
  %p91 = scmp.lt.s32.totalorder %s90, 0
  %s92 = scalar_select %p91, %s90, 0
  %s93 = sadd.s32 0, 0
  %p94 = scmp.lt.s32.totalorder %s93, 0
  %s95 = scalar_select %p94, %s93, 0
  %p96 = scmp.lt.s32.totalorder %s95, 0
  %s97 = scalar_select %p96, %s95, 0
  %s98 = smul.addr %s97, 4
  %s99 = scalar_lea.vmem %s1, %s98
  %s100 = sadd.s32 0, 0
  %p101 = scmp.lt.s32.totalorder %s100, 0
  %s102 = scalar_select %p101, %s100, 0
  %s103 = sadd.s32 0, 0
  %p104 = scmp.lt.s32.totalorder %s103, 0
  %s105 = scalar_select %p104, %s103, 0
  %p106 = scmp.lt.s32.totalorder %s105, 0
  %s107 = scalar_select %p106, %s105, 0
  %s108 = smul.addr %s107, 8
  %s109 = scalar_lea.vmem %s2, %s108
  %s110 = sadd.s32 0, 0
  %p111 = scmp.lt.s32.totalorder %s110, 0
  %s112 = scalar_select %p111, %s110, 0
  %s113 = sadd.s32 0, 0
  %p114 = scmp.lt.s32.totalorder %s113, 0
  %s115 = scalar_select %p114, %s113, 0
  %p116 = scmp.lt.s32.totalorder %s115, 0
  %s117 = scalar_select %p116, %s115, 0
  %s118 = scalar_lea.vmem %s3, %s117
  %s119 = sadd.s32 0, 0
  %p120 = scmp.lt.s32.totalorder %s119, 0
  %s121 = scalar_select %p120, %s119, 0
  %p122 = scmp.eq.s32.totalorder 0, 0
  // Predicated region
  $region18: #{multibox_loss.1} parent=0 // pred_check
    %p123 = pneg %p122
  $region19: #{multibox_loss.1} parent=0 // pred_check_branch
    %125 = sbr.rel (%p123) target = $region21
  $region20: #{multibox_loss.1} parent=0 // pred_region
    %126 = vst [vmem:[%s4] sm:$0x3] 0.0
  $region21: #{multibox_loss.1} parent=0 // pred_fallthru
    _
  %v127 = vld [vmem:[%s118] sm:$0x1]
  %vm128 = vcmp.ne.s32.totalorder %v127, 0
  %v129 = vld [vmem:[%s89] sm:$0xf]
  %v130 = vld [vmem:[%s99] sm:$0xf]
  %v131 = vsub.f32 %v129, %v130
  %v132 = vand.u32 2147483647, %v131
  %vm133 = vcmp.lt.f32.partialorder %v132, 1.0
  %v134 = vmul.f32 %v131, 0.5
  %v135 = vmul.f32 %v134, %v131
  %v136 = vsub.f32 %v132, 0.5
  %v137 = vsel %vm133, %v135, %v136
  %vm138 = vcmask 1043456
  %v139 = vsel %vm138, %v137, 0.0
  %v140 = vrot.slane %v139, 4
  %v141 = vadd.f32 %v139, %v140
  %v142 = vrot.slane %v141, 2
  %v143 = vadd.f32 %v141, %v142
  %v144 = vrot.slane %v143, 1
  %v145 = vadd.f32 %v143, %v144
  %v146 = vld [vmem:[%s109] sm:$0xff]
  %v147 = vrot.slane %v146, 4
  %v148 = vmax.f32 %v146, %v147
  %v149 = vrot.slane %v148, 2
  %v150 = vmax.f32 %v148, %v149
  %v151 = vrot.slane %v150, 1
  %v152 = vmax.f32 %v150, %v151
  %v153 = vsub.f32 %v146, %v152
  %v154 = vmul.f32 %v153, 1.442695
  %v155 = vpow.pop %v154
  %v156 = vrot.slane %v155, 4
  %v157 = vadd.f32 %v155, %v156
  %v158 = vrot.slane %v157, 2
  %v159 = vadd.f32 %v157, %v158
  %v160 = vrot.slane %v159, 1
  %v161 = vadd.f32 %v159, %v160
  %v162 = vlog2.pop %v161
  %v163 = vmul.f32 %v162, 0.6931472
  %v164 = vadd.f32 %v152, %v163
  %v165 = vlaneseq
  %v166 = vshrl.u32 %v165, 7
  %v167 = vperm.slane %v127, 0
  %vm168 = vcmp.eq.s32.totalorder %v166, %v167
  %v169 = vsel %vm168, %v146, 0.0
  %v170 = vrot.slane %v169, 4
  %v171 = vadd.f32 %v169, %v170
  %v172 = vrot.slane %v171, 2
  %v173 = vadd.f32 %v171, %v172
  %v174 = vrot.slane %v173, 1
  %v175 = vadd.f32 %v173, %v174
  %v176 = vsub.f32 %v164, %v175
  %s177 = sadd.s32 0, 0
  %s178 = smul.u32 %s177, 128
  %s179 = sadd.s32 %s178, 128
  %p180 = scmp.le.s32.totalorder %s179, 128
  // Predicated region
  $region22: #{multibox_loss.1} parent=0 // pred_check
    %p181 = pneg %p180
  $region23: #{multibox_loss.1} parent=0 // pred_check_branch
    %183 = sbr.rel (%p181) target = $region25
  $region24: #{multibox_loss.1} parent=0 // pred_region
    %v184 = vld [vmem:[%s4] sm:$0x1]
    %v185 = vsel %vm128, %v145, 0.0
    %v186 = vadd.f32 %v185, %v176
    %v187 = vadd.f32 %v184, %v186
    %188 = vst [vmem:[%s4] sm:$0x1] %v187
    %v189 = vld [vmem:[%s4 + $0x1] sm:$0x1]
    %v190 = vsel %vm128, 1, 0
    %v191 = vcvt.s32.f32 %v190
    %v192 = vadd.f32 %v189, %v191
    %193 = vst [vmem:[%s4 + $0x1] sm:$0x1] %v192
  $region25: #{multibox_loss.1} parent=0 // pred_fallthru
    _
  %p194 = scmp.gt.s32.totalorder %s179, 128
  // Predicated region
  $region26: #{multibox_loss.1} parent=0 // pred_check
    %p195 = pneg %p194
  $region27: #{multibox_loss.1} parent=0 // pred_check_branch
    %197 = sbr.rel (%p195) target = $region29
  $region28: #{multibox_loss.1} parent=0 // pred_region
    %v198 = vlaneseq
    %v199 = vand.u32 %v198, 127
    %v200 = vstv %s178
    %v201 = vadd.s32 %v200, %v199
    %vm202 = vcmp.lt.s32.totalorder %v201, 128
    %vm203 = vmand %vm202, %vm128
    %v204 = vld [vmem:[%s4] sm:$0x1]
    %v205 = vsel %vm203, %v145, 0.0
    %v206 = vsel %vm202, %v176, 0.0
    %v207 = vadd.f32 %v205, %v206
    %v208 = vadd.f32 %v204, %v207
    %209 = vst [vmem:[%s4] sm:$0x1] %v208
    %v210 = vld [vmem:[%s4 + $0x1] sm:$0x1]
    %v211 = vsel %vm203, 1, 0
    %v212 = vcvt.s32.f32 %v211
    %v213 = vadd.f32 %v210, %v212
    %214 = vst [vmem:[%s4 + $0x1] sm:$0x1] %v213
  $region29: #{multibox_loss.1} parent=0 // pred_fallthru
    _
  // Predicated region
  $region30: #{multibox_loss.1} parent=0 // pred_check
    _
  $region31: #{multibox_loss.1} parent=0 // pred_check_branch
    %216 = sbr.rel (0) target = $region33
  $region32: #{multibox_loss.1} parent=0 // pred_region
    _
  $region33: #{multibox_loss.1} parent=0 // pred_fallthru
    _
  // Predicated region
  $region34: #{multibox_loss.1} parent=0 // pred_check
    _
  $region35: #{multibox_loss.1} parent=0 // pred_check_branch
    %218 = sbr.rel (0) target = $region37
  $region36: #{multibox_loss.1} parent=0 // pred_region
    _
  $region37: #{multibox_loss.1} parent=0 // pred_fallthru
    _

</llo_original>
